<compile_context>
chip_gen: v7x
topology: tpu7x:2x2x1
jax: 0.10.0
libtpu: 0.0.40
codegen_flags: <defaults>
</compile_context>

<pallas_src>
import functools

import jax
import jax.numpy as jnp
from jax.experimental import pallas as pl
from jax.experimental.pallas import tpu as pltpu

_LANE = 128     # lane width of a vreg
_SUBLANE = 8    # sublane count of a vreg


def _round_up(n, m):
    return (n + m - 1) // m * m


def _action_mapper_kernel(x_ref, w1_ref, b1_ref, w2_ref, b2_ref, o_ref,
                          *, max_action):
    # Layer 1: x @ w1 + b1, ReLU.  MXU matmul with f32 accumulation; bias add
    # and relu stay in f32 on the VPU.
    h = jnp.dot(x_ref[...], w1_ref[...], preferred_element_type=jnp.float32)
    h = jnp.maximum(h + b1_ref[...], 0.0)

    # Layer 2: h @ w2 + b2, tanh, scale.  Cast h back to the matmul dtype
    # (no-op for the f32 path, bf16 for the bf16 path); tanh (EUP) in f32.
    h = h.astype(w2_ref.dtype)
    y = jnp.dot(h, w2_ref[...], preferred_element_type=jnp.float32)
    y = max_action * jnp.tanh(y + b2_ref[...])
    o_ref[...] = y.astype(o_ref.dtype)


def action_mapper_forward(x, w1, b1, w2, b2, max_action, *,
                          block_b=1024, dot_dtype=None):
    """Pallas TPU implementation of ActionMapper.forward.

    x  : (B, F)    w1 : (F, H)   b1 : (1, H)
    w2 : (H, A)    b2 : (1, A)   ->  (B, A)
    """
    B, F = x.shape
    H = w1.shape[1]
    A = w2.shape[1]
    assert w1.shape == (F, H) and b1.shape == (1, H)
    assert w2.shape == (H, A) and b2.shape == (1, A)

    out_dtype = x.dtype

    # --- lane-align hidden and output dims (zero padding keeps math exact) ---
    Hp = _round_up(H, _LANE)          # 300 -> 384
    Ap = _round_up(A, _LANE)          # A   -> 128 (lane-dense stores)
    w1p = jnp.pad(w1, ((0, 0), (0, Hp - H)))
    b1p = jnp.pad(b1, ((0, 0), (0, Hp - H))).astype(jnp.float32)
    w2p = jnp.pad(w2, ((0, Hp - H), (0, Ap - A)))
    b2p = jnp.pad(b2, ((0, 0), (0, Ap - A))).astype(jnp.float32)

    # --- batch tiling: sublane-aligned tile, padded batch, pipelined grid ---
    TB = _round_up(min(block_b, _round_up(B, _SUBLANE)), _SUBLANE)
    Bp = _round_up(B, TB)
    xp = jnp.pad(x, ((0, Bp - B), (0, 0)))

    # Optional reduced-precision matmul path (weights / activations only).
    if dot_dtype is not None:
        xp = xp.astype(dot_dtype)
        w1p = w1p.astype(dot_dtype)
        w2p = w2p.astype(dot_dtype)

    kernel = functools.partial(_action_mapper_kernel,
                               max_action=float(max_action))

    out_padded = pl.pallas_call(
        kernel,
        out_shape=jax.ShapeDtypeStruct((Bp, Ap), out_dtype),
        grid=(Bp // TB,),
        in_specs=[
            pl.BlockSpec((TB, F), lambda i: (i, 0)),    # x tile: batch-tiled
            pl.BlockSpec((F, Hp), lambda i: (0, 0)),    # w1: VMEM-resident
            pl.BlockSpec((1, Hp), lambda i: (0, 0)),    # b1: VMEM-resident
            pl.BlockSpec((Hp, Ap), lambda i: (0, 0)),   # w2: VMEM-resident
            pl.BlockSpec((1, Ap), lambda i: (0, 0)),    # b2: VMEM-resident
        ],
        out_specs=pl.BlockSpec((TB, Ap), lambda i: (i, 0)),
        compiler_params=pltpu.CompilerParams(
            dimension_semantics=("parallel",)),         # megacore on v7x
    )(xp, w1p, b1p, w2p, b2p)

    return out_padded[:B, :A]


def init_action_mapper_params(key, feature_dim, action_dim, hidden=300,
                              dtype=jnp.float32):
    """Deterministic init mimicking PyTorch nn.Linear default U(-1/sqrt(fan_in), +)."""
    k1, k2, k3, k4 = jax.random.split(key, 4)
    bound1 = 1.0 / jnp.sqrt(feature_dim)
    bound2 = 1.0 / jnp.sqrt(hidden)
    w1 = jax.random.uniform(k1, (feature_dim, hidden), dtype,
                            minval=-bound1, maxval=bound1)
    b1 = jax.random.uniform(k2, (1, hidden), dtype,
                            minval=-bound1, maxval=bound1)
    w2 = jax.random.uniform(k3, (hidden, action_dim), dtype,
                            minval=-bound2, maxval=bound2)
    b2 = jax.random.uniform(k4, (1, action_dim), dtype,
                            minval=-bound2, maxval=bound2)
    return w1, b1, w2, b2


def _reference(x, w1, b1, w2, b2, max_action):
    return max_action * jnp.tanh(jnp.maximum(x @ w1 + b1, 0.0) @ w2 + b2)


if __name__ == "__main__":
    key = jax.random.PRNGKey(0)
    k_x, k_x2, k_p = jax.random.split(key, 3)

    feature_dim = 32
    action_dim = 4
    max_action = 1.5
    w1, b1, w2, b2 = init_action_mapper_params(k_p, feature_dim, action_dim)

    # --- small-batch case (matches the module's typical usage) ---
    batch = 2
    x = jax.random.normal(k_x, (batch, feature_dim), jnp.float32)
    out = action_mapper_forward(x, w1, b1, w2, b2, max_action)
    out = jax.block_until_ready(out)
    ref = _reference(x, w1, b1, w2, b2, max_action)
    assert out.shape == (batch, action_dim)
    assert jnp.allclose(out, ref, atol=1e-5, rtol=1e-5)

    # --- larger batch exercising the pipelined batch grid (3 tiles + tail pad) ---
    batch2 = 300
    x2 = jax.random.normal(k_x2, (batch2, feature_dim), jnp.float32)
    out2 = jax.block_until_ready(
        action_mapper_forward(x2, w1, b1, w2, b2, max_action, block_b=128))
    ref2 = _reference(x2, w1, b1, w2, b2, max_action)
    assert out2.shape == (batch2, action_dim)
    assert jnp.allclose(out2, ref2, atol=1e-5, rtol=1e-5)

    # --- bf16 matmul path (halves DMA bytes, native bf16 MXU); looser tolerance ---
    out_bf16 = jax.block_until_ready(
        action_mapper_forward(x2, w1, b1, w2, b2, max_action,
                              block_b=128, dot_dtype=jnp.bfloat16))
    assert jnp.allclose(out_bf16, ref2, atol=5e-2, rtol=5e-2)

    print("KERNEL_OK")
</pallas_src>

<mosaic_0001>
module attributes {stable_mosaic.version = 11 : i64} {
  func.func @_action_mapper_kernel(%arg0: i32, %arg1: memref<8x32xf32, #tpu.memory_space<vmem>>, %arg2: memref<32x384xf32, #tpu.memory_space<vmem>>, %arg3: memref<1x384xf32, #tpu.memory_space<vmem>>, %arg4: memref<384x128xf32, #tpu.memory_space<vmem>>, %arg5: memref<1x128xf32, #tpu.memory_space<vmem>>, %arg6: memref<8x128xf32, #tpu.memory_space<vmem>>) attributes {dimension_semantics = [#tpu.dimension_semantics<parallel>], iteration_bounds = array<i64: 1>, scalar_prefetch = 0 : i64, scratch_operands = 0 : i64, tpu.core_type = #tpu.core_type<tc>, window_params = [{transform_indices = @transform_0, window_bounds = array<i64: 8, 32>}, {pipeline_mode = #tpu.pipeline_mode<synchronous>, transform_indices = @transform_1, window_bounds = array<i64: 32, 384>}, {pipeline_mode = #tpu.pipeline_mode<synchronous>, transform_indices = @transform_2, window_bounds = array<i64: 1, 384>}, {pipeline_mode = #tpu.pipeline_mode<synchronous>, transform_indices = @transform_3, window_bounds = array<i64: 384, 128>}, {pipeline_mode = #tpu.pipeline_mode<synchronous>, transform_indices = @transform_4, window_bounds = array<i64: 1, 128>}, {transform_indices = @transform_5, window_bounds = array<i64: 8, 128>}]} {
    %c0 = arith.constant 0 : index
    %c0_0 = arith.constant 0 : index
    %0 = vector.load %arg1[%c0, %c0_0] : memref<8x32xf32, #tpu.memory_space<vmem>>, vector<8x32xf32>
    %c0_1 = arith.constant 0 : index
    %c0_2 = arith.constant 0 : index
    %1 = vector.load %arg2[%c0_1, %c0_2] : memref<32x384xf32, #tpu.memory_space<vmem>>, vector<32x384xf32>
    %cst = arith.constant dense<0.000000e+00> : vector<8x384xf32>
    %2 = tpu.matmul %0, %1, %cst {dimension_numbers = #tpu.dot_dimension_numbers<[1], [0], [0], [1], [0, 0, 1, 1], [], []>} : vector<8x32xf32>, vector<32x384xf32>, vector<8x384xf32> -> vector<8x384xf32>
    %c0_3 = arith.constant 0 : index
    %c0_4 = arith.constant 0 : index
    %3 = vector.load %arg3[%c0_3, %c0_4] : memref<1x384xf32, #tpu.memory_space<vmem>>, vector<1x384xf32>
    %4 = vector.broadcast %3 : vector<1x384xf32> to vector<8x384xf32>
    %5 = arith.addf %2, %4 : vector<8x384xf32>
    %cst_5 = arith.constant 0.000000e+00 : f32
    %6 = vector.broadcast %cst_5 : f32 to vector<8x384xf32>
    %7 = arith.maximumf %5, %6 : vector<8x384xf32>
    %c0_6 = arith.constant 0 : index
    %c0_7 = arith.constant 0 : index
    %8 = vector.load %arg4[%c0_6, %c0_7] : memref<384x128xf32, #tpu.memory_space<vmem>>, vector<384x128xf32>
    %cst_8 = arith.constant dense<0.000000e+00> : vector<8x128xf32>
    %9 = tpu.matmul %7, %8, %cst_8 {dimension_numbers = #tpu.dot_dimension_numbers<[1], [0], [0], [1], [0, 0, 1, 1], [], []>} : vector<8x384xf32>, vector<384x128xf32>, vector<8x128xf32> -> vector<8x128xf32>
    %c0_9 = arith.constant 0 : index
    %c0_10 = arith.constant 0 : index
    %10 = vector.load %arg5[%c0_9, %c0_10] : memref<1x128xf32, #tpu.memory_space<vmem>>, vector<1x128xf32>
    %11 = vector.broadcast %10 : vector<1x128xf32> to vector<8x128xf32>
    %12 = arith.addf %9, %11 : vector<8x128xf32>
    %13 = math.tanh %12 : vector<8x128xf32>
    %cst_11 = arith.constant 1.500000e+00 : f32
    %14 = vector.broadcast %cst_11 : f32 to vector<8x128xf32>
    %15 = arith.mulf %14, %13 : vector<8x128xf32>
    %c0_12 = arith.constant 0 : index
    %c0_13 = arith.constant 0 : index
    %16 = vector.load %arg6[%c0_12, %c0_13] : memref<8x128xf32, #tpu.memory_space<vmem>>, vector<8x128xf32>
    tpu.vector_store %arg6[%c0_12, %c0_13], %15 {strides = array<i32>} : memref<8x128xf32, #tpu.memory_space<vmem>>, vector<8x128xf32>,
    return
  }
  func.func @transform_0(%arg0: i32) -> (i32, i32) {
    %c0_i32 = arith.constant 0 : i32
    %c0_i32_0 = arith.constant 0 : i32
    return %arg0, %c0_i32 : i32, i32
  }
  func.func @transform_1(%arg0: i32) -> (i32, i32) {
    %c0_i32 = arith.constant 0 : i32
    %c0_i32_0 = arith.constant 0 : i32
    %c0_i32_1 = arith.constant 0 : i32
    return %c0_i32, %c0_i32_0 : i32, i32
  }
  func.func @transform_2(%arg0: i32) -> (i32, i32) {
    %c0_i32 = arith.constant 0 : i32
    %c0_i32_0 = arith.constant 0 : i32
    %c0_i32_1 = arith.constant 0 : i32
    return %c0_i32, %c0_i32_0 : i32, i32
  }
  func.func @transform_3(%arg0: i32) -> (i32, i32) {
    %c0_i32 = arith.constant 0 : i32
    %c0_i32_0 = arith.constant 0 : i32
    %c0_i32_1 = arith.constant 0 : i32
    return %c0_i32, %c0_i32_0 : i32, i32
  }
  func.func @transform_4(%arg0: i32) -> (i32, i32) {
    %c0_i32 = arith.constant 0 : i32
    %c0_i32_0 = arith.constant 0 : i32
    %c0_i32_1 = arith.constant 0 : i32
    return %c0_i32, %c0_i32_0 : i32, i32
  }
  func.func @transform_5(%arg0: i32) -> (i32, i32) {
    %c0_i32 = arith.constant 0 : i32
    %c0_i32_0 = arith.constant 0 : i32
    return %arg0, %c0_i32 : i32, i32
  }
}

</mosaic_0001>

<llo_original>
// kernel: tpu_custom_call.1
$region0: #{tpu_custom_call.1}
  #allocation0 [shape = 'u32[]', space=smem, size = 0x4, offset = 0x4, fixed_abs, tag = 'smem constant byte address 0x4 - core index']
  #allocation1 [shape = 'u32[144,128]{1,0:T(1,128)}', space=vmem, size = 0x12000, scoped, tag = 'internal scratch']
  %s0 = inlined_call_operand.hbm [shape: f32[8,32], index: 0, kind: input, shape index: {}]
  %s1 = inlined_call_operand.hbm [shape: f32[32,384], index: 1, kind: input, shape index: {}]
  %s2 = inlined_call_operand.vmem [shape: f32[1,384], index: 2, kind: input, shape index: {}]
  %s3 = inlined_call_operand.hbm [shape: f32[384,128], index: 3, kind: input, shape index: {}]
  %s4 = inlined_call_operand.vmem [shape: f32[1,128], index: 4, kind: input, shape index: {}]
  %s5 = inlined_call_operand.hbm [shape: f32[8,128], index: 5, kind: output, shape index: {}]
  %s6 = sld [smem:[#allocation0]]
  $region42: #{tpu_custom_call.1} parent=0
    _
  %s8 = ssub.s32 1, %s6
  %s9 = scalar_select 0, %s8, %s6
  $region1: #{tpu_custom_call.1} parent=0
    #allocation2 [shape = 'u8[4096]{0}', space=vmem, size = 0x1000, scoped, tag = 'input window, operand 0, single buffered']
    #allocation3 [shape = 's32[1]{0}', space=sflag, size = 0x4, scoped, tag = 'scoped memory for tpu_custom_call.1']
    #allocation4 [shape = 's32[1]{0}', space=sflag, size = 0x4, scoped, tag = 'scoped memory for tpu_custom_call.1']
    #allocation5 [shape = 'u8[49152]{0}', space=vmem, size = 0xc000, scoped, tag = 'input window, operand 1, single buffered']
    #allocation6 [shape = 's32[1]{0}', space=sflag, size = 0x4, scoped, tag = 'scoped memory for tpu_custom_call.1']
    #allocation7 [shape = 'u8[196608]{0}', space=vmem, size = 0x30000, scoped, tag = 'input window, operand 3, single buffered']
    #allocation8 [shape = 'u8[4096]{0}', space=vmem, size = 0x1000, scoped, tag = 'output window, operand 0, single buffered']
    %10 = vsyncpa [#allocation3], 0
    %11 = vsyncpa [#allocation6], 0
    %12 = vsyncpa [#allocation4], 0
    // Predicated region
    $region2: #{tpu_custom_call.1} parent=1 // pred_check
      _
    $region3: #{tpu_custom_call.1} parent=1 // pred_check_branch
      %14 = sbr.rel (0) target = $region5
    $region4: #{tpu_custom_call.1} parent=1 // pred_region
      %s16 = ssub.s32 128, 128
      %17 = vsyncadd [#allocation3], %s16
      %s19 = sshll.u32 [#allocation2], 4
      %s20 = int_to_ptr.vmem [resolvable:$true] %s19
      %22 = dma.hbm_to_vmem [thread:$0]  %s0, 128, %s20, [#allocation3]
    $region5: #{tpu_custom_call.1} parent=1 // pred_fallthru
      _
    // Predicated region
    $region6: #{tpu_custom_call.1} parent=1 // pred_check
      _
    $region7: #{tpu_custom_call.1} parent=1 // pred_check_branch
      %24 = sbr.rel (0) target = $region9
    $region8: #{tpu_custom_call.1} parent=1 // pred_region
      %s26 = ssub.s32 1536, 1536
      %27 = vsyncadd [#allocation6], %s26
      %s28 = sshll.u32 [#allocation5], 4
      %s29 = int_to_ptr.vmem [resolvable:$true] %s28
      %34 = dma.hbm_to_vmem [thread:$0]  %s1, 1536, %s29, [#allocation6], 384, 384, 24
    $region9: #{tpu_custom_call.1} parent=1 // pred_fallthru
      _
    // Predicated region
    $region10: #{tpu_custom_call.1} parent=1 // pred_check
      _
    $region11: #{tpu_custom_call.1} parent=1 // pred_check_branch
      %36 = sbr.rel (0) target = $region13
    $region12: #{tpu_custom_call.1} parent=1 // pred_region
      _
    $region13: #{tpu_custom_call.1} parent=1 // pred_fallthru
      _
    // Predicated region
    $region14: #{tpu_custom_call.1} parent=1 // pred_check
      _
    $region15: #{tpu_custom_call.1} parent=1 // pred_check_branch
      %38 = sbr.rel (0) target = $region17
    $region16: #{tpu_custom_call.1} parent=1 // pred_region
      %s40 = ssub.s32 6144, 6144
      %41 = vsyncadd [#allocation6], %s40
      %s42 = sshll.u32 [#allocation7], 4
      %s43 = int_to_ptr.vmem [resolvable:$true] %s42
      %48 = dma.hbm_to_vmem [thread:$0]  %s3, 6144, %s43, [#allocation6], 128, 128, 8
    $region17: #{tpu_custom_call.1} parent=1 // pred_fallthru
      _
    // Predicated region
    $region18: #{tpu_custom_call.1} parent=1 // pred_check
      _
    $region19: #{tpu_custom_call.1} parent=1 // pred_check_branch
      %50 = sbr.rel (0) target = $region21
    $region20: #{tpu_custom_call.1} parent=1 // pred_region
      _
    $region21: #{tpu_custom_call.1} parent=1 // pred_fallthru
      _
    // Predicated region
    $region22: #{tpu_custom_call.1} parent=1 // pred_check
      _
    $region23: #{tpu_custom_call.1} parent=1 // pred_check_branch
      %52 = sbr.rel (0) target = $region25
    $region24: #{tpu_custom_call.1} parent=1 // pred_region
      %53 = dma.done [#allocation3], 128
    $region25: #{tpu_custom_call.1} parent=1 // pred_fallthru
      _
    // Predicated region
    $region26: #{tpu_custom_call.1} parent=1 // pred_check
      _
    $region27: #{tpu_custom_call.1} parent=1 // pred_check_branch
      %55 = sbr.rel (0) target = $region29
    $region28: #{tpu_custom_call.1} parent=1 // pred_region
      %56 = dma.done [#allocation6], 1536
    $region29: #{tpu_custom_call.1} parent=1 // pred_fallthru
      _
    // Predicated region
    $region30: #{tpu_custom_call.1} parent=1 // pred_check
      _
    $region31: #{tpu_custom_call.1} parent=1 // pred_check_branch
      %58 = sbr.rel (0) target = $region33
    $region32: #{tpu_custom_call.1} parent=1 // pred_region
      %59 = dma.done [#allocation6], 6144
    $region33: #{tpu_custom_call.1} parent=1 // pred_fallthru
      _
    %v60 = vld [vmem:[#allocation2] sm:$0xff]
    %v61 = vld [vmem:[#allocation5] sm:$0xff]
    %v62 = vld [vmem:[#allocation5 + $0x8] sm:$0xff]
    %v63 = vld [vmem:[#allocation5 + $0x10] sm:$0xff]
    %v64 = vld [vmem:[#allocation5 + $0x18] sm:$0xff]
    %v65 = vld [vmem:[#allocation5 + $0x20] sm:$0xff]
    %v66 = vld [vmem:[#allocation5 + $0x28] sm:$0xff]
    %v67 = vld [vmem:[#allocation5 + $0x30] sm:$0xff]
    %v68 = vld [vmem:[#allocation5 + $0x38] sm:$0xff]
    %v69 = vld [vmem:[#allocation5 + $0x40] sm:$0xff]
    %v70 = vld [vmem:[#allocation5 + $0x48] sm:$0xff]
    %v71 = vld [vmem:[#allocation5 + $0x50] sm:$0xff]
    %v72 = vld [vmem:[#allocation5 + $0x58] sm:$0xff]
    %v73 = vld [vmem:[%s2] sm:$0x7]
    %v75 = vlaneseq
    %v76 = vshrl.u32 %v75, 7
    %v77 = vsub.s32 0, %v76
    %v78 = vrot.slane %v73, %v77
    %v79 = vlaneseq
    %v80 = vshrl.u32 %v79, 7
    %v81 = vsub.s32 1, %v80
    %v82 = vrot.slane %v73, %v81
    %v83 = vlaneseq
    %v84 = vshrl.u32 %v83, 7
    %v85 = vsub.s32 2, %v84
    %v86 = vrot.slane %v73, %v85
    %vm90 = vcmask 261120
    %v92 = vsel %vm90, %v60, 0
    %94 = vmatprep.subr.mxu0 %v62
    %95 = vmatpush1.msra.mxu0 %v61
    %96 = vmatprep.subr.mxu0 %v65
    %97 = vmatpush1.msra.mxu0 %v64
    %98 = vmatprep.subr.mxu0 %v68
    %99 = vmatpush1.msra.mxu0 %v67
    %100 = vmatprep.subr.mxu0 %v71
    %101 = vmatpush1.msra.mxu0 %v70
    %102 = vmatprep.subr.mxu0 0.0
    %103 = vmatpush1.msra.mxu0 0.0
    %104 = vmatprep.subr.mxu0 0.0
    %105 = vmatpush1.msra.mxu0 0.0
    %106 = vmatprep.subr.mxu0 0.0
    %107 = vmatpush1.msra.mxu0 0.0
    %108 = vmatprep.subr.mxu0 0.0
    %109 = vmatpush1.msra.mxu0 0.0
    %110 = vmatprep.subr.mxu0 0.0
    %111 = vmatpush1.msra.mxu0 0.0
    %112 = vmatprep.subr.mxu0 0.0
    %113 = vmatpush1.msra.mxu0 0.0
    %114 = vmatprep.subr.mxu0 0.0
    %115 = vmatpush1.msra.mxu0 0.0
    %116 = vmatprep.subr.mxu0 0.0
    %117 = vmatpush1.msra.mxu0 0.0
    %118 = vmatprep.subr.mxu0 0.0
    %119 = vmatpush1.msra.mxu0 0.0
    %120 = vmatprep.subr.mxu0 0.0
    %121 = vmatpush1.msra.mxu0 0.0
    %122 = vmatprep.subr.mxu0 0.0
    %123 = vmatpush1.msra.mxu0 0.0
    %124 = vmatprep.subr.mxu0 0.0
    %125 = vmatpush1.msra.mxu0 0.0
    %126 = vmatprep.subr.mxu0 0.0
    %127 = vmatpush1.msra.mxu0 0.0
    %128 = vmatprep.subr.mxu0 0.0
    %129 = vmatpush1.msra.mxu0 0.0
    %130 = vmatprep.subr.mxu0 0.0
    %131 = vmatpush1.msra.mxu0 0.0
    %132 = vmatprep.subr.mxu0 0.0
    %133 = vmatpush1.msra.mxu0 0.0
    %134 = vmatprep.subr.mxu0 0.0
    %135 = vmatpush1.msra.mxu0 0.0
    %136 = vmatprep.subr.mxu0 0.0
    %137 = vmatpush1.msra.mxu0 0.0
    %138 = vmatprep.subr.mxu0 0.0
    %139 = vmatpush1.msra.mxu0 0.0
    %140 = vmatprep.subr.mxu0 0.0
    %141 = vmatpush1.msra.mxu0 0.0
    %142 = vmatprep.subr.mxu0 0.0
    %143 = vmatpush1.msra.mxu0 0.0
    %144 = vmatprep.subr.mxu0 0.0
    %145 = vmatpush1.msra.mxu0 0.0
    %146 = vmatprep.subr.mxu0 0.0
    %147 = vmatpush1.msra.mxu0 0.0
    %148 = vmatprep.subr.mxu0 0.0
    %149 = vmatpush1.msra.mxu0 0.0
    %150 = vmatprep.subr.mxu0 0.0
    %151 = vmatpush1.msra.mxu0 0.0
    %152 = vmatprep.subr.mxu0 0.0
    %153 = vmatpush1.msra.mxu0 0.0
    %154 = vmatprep.subr.mxu0 0.0
    %155 = vmatpush1.msra.mxu0 0.0
    %156 = vmatprep.subr.mxu0 0.0
    %157 = vmatpush1.msra.mxu0 0.0
    %158 = vmatprep.mubr.f32.mxu0 0.0
    %159 = vmatmul.mubr.f32.gmra.mrb[0].mxu0 %v92
    %v160 = vpop.f32.mrb[0].mxu0
    %v161 = vadd.f32 %v78, %v160
    %v162 = vpop.f32.mrb[0].mxu0
    %v163 = vadd.f32 %v82, %v162
    %164 = vdwg.mxu0
    %165 = vmatprep.subr.mxu0 0.0
    %166 = vmatpush1.msra.mxu0 %v63
    %167 = vmatprep.subr.mxu0 0.0
    %168 = vmatpush1.msra.mxu0 %v66
    %169 = vmatprep.subr.mxu0 0.0
    %170 = vmatpush1.msra.mxu0 %v69
    %171 = vmatprep.subr.mxu0 0.0
    %172 = vmatpush1.msra.mxu0 %v72
    %173 = vmatprep.subr.mxu0 0.0
    %174 = vmatpush1.msra.mxu0 0.0
    %175 = vmatprep.subr.mxu0 0.0
    %176 = vmatpush1.msra.mxu0 0.0
    %177 = vmatprep.subr.mxu0 0.0
    %178 = vmatpush1.msra.mxu0 0.0
    %179 = vmatprep.subr.mxu0 0.0
    %180 = vmatpush1.msra.mxu0 0.0
    %181 = vmatprep.subr.mxu0 0.0
    %182 = vmatpush1.msra.mxu0 0.0
    %183 = vmatprep.subr.mxu0 0.0
    %184 = vmatpush1.msra.mxu0 0.0
    %185 = vmatprep.subr.mxu0 0.0
    %186 = vmatpush1.msra.mxu0 0.0
    %187 = vmatprep.subr.mxu0 0.0
    %188 = vmatpush1.msra.mxu0 0.0
    %189 = vmatprep.subr.mxu0 0.0
    %190 = vmatpush1.msra.mxu0 0.0
    %191 = vmatprep.subr.mxu0 0.0
    %192 = vmatpush1.msra.mxu0 0.0
    %193 = vmatprep.subr.mxu0 0.0
    %194 = vmatpush1.msra.mxu0 0.0
    %195 = vmatprep.subr.mxu0 0.0
    %196 = vmatpush1.msra.mxu0 0.0
    %197 = vmatprep.subr.mxu0 0.0
    %198 = vmatpush1.msra.mxu0 0.0
    %199 = vmatprep.subr.mxu0 0.0
    %200 = vmatpush1.msra.mxu0 0.0
    %201 = vmatprep.subr.mxu0 0.0
    %202 = vmatpush1.msra.mxu0 0.0
    %203 = vmatprep.subr.mxu0 0.0
    %204 = vmatpush1.msra.mxu0 0.0
    %205 = vmatprep.subr.mxu0 0.0
    %206 = vmatpush1.msra.mxu0 0.0
    %207 = vmatprep.subr.mxu0 0.0
    %208 = vmatpush1.msra.mxu0 0.0
    %209 = vmatprep.subr.mxu0 0.0
    %210 = vmatpush1.msra.mxu0 0.0
    %211 = vmatprep.subr.mxu0 0.0
    %212 = vmatpush1.msra.mxu0 0.0
    %213 = vmatprep.subr.mxu0 0.0
    %214 = vmatpush1.msra.mxu0 0.0
    %215 = vmatprep.subr.mxu0 0.0
    %216 = vmatpush1.msra.mxu0 0.0
    %217 = vmatprep.subr.mxu0 0.0
    %218 = vmatpush1.msra.mxu0 0.0
    %219 = vmatprep.subr.mxu0 0.0
    %220 = vmatpush1.msra.mxu0 0.0
    %221 = vmatprep.subr.mxu0 0.0
    %222 = vmatpush1.msra.mxu0 0.0
    %223 = vmatprep.subr.mxu0 0.0
    %224 = vmatpush1.msra.mxu0 0.0
    %225 = vmatprep.subr.mxu0 0.0
    %226 = vmatpush1.msra.mxu0 0.0
    %227 = vmatprep.subr.mxu0 0.0
    %228 = vmatpush1.msra.mxu0 0.0
    %229 = vmatprep.mubr.f32.mxu0 0.0
    %230 = vmatmul.mubr.f32.gmra.mrb[0].mxu0 %v92
    %v231 = vpop.f32.mrb[0].mxu0
    %v232 = vadd.f32 %v86, %v231
    %v233 = vpop.f32.mrb[0].mxu0
    %234 = vdwg.mxu0
    %v235 = vmax.f32 %v161, 0.0
    %v236 = vmax.f32 %v163, 0.0
    %v237 = vmax.f32 %v232, 0.0
    %v238 = vld [vmem:[#allocation7] sm:$0xff]
    %v239 = vld [vmem:[#allocation7 + $0x8] sm:$0xff]
    %v240 = vld [vmem:[#allocation7 + $0x10] sm:$0xff]
    %v241 = vld [vmem:[#allocation7 + $0x18] sm:$0xff]
    %v242 = vld [vmem:[#allocation7 + $0x20] sm:$0xff]
    %v243 = vld [vmem:[#allocation7 + $0x28] sm:$0xff]
    %v244 = vld [vmem:[#allocation7 + $0x30] sm:$0xff]
    %v245 = vld [vmem:[#allocation7 + $0x38] sm:$0xff]
    %v246 = vld [vmem:[#allocation7 + $0x40] sm:$0xff]
    %v247 = vld [vmem:[#allocation7 + $0x48] sm:$0xff]
    %v248 = vld [vmem:[#allocation7 + $0x50] sm:$0xff]
    %v249 = vld [vmem:[#allocation7 + $0x58] sm:$0xff]
    %v250 = vld [vmem:[#allocation7 + $0x60] sm:$0xff]
    %v251 = vld [vmem:[#allocation7 + $0x68] sm:$0xff]
    %v252 = vld [vmem:[#allocation7 + $0x70] sm:$0xff]
    %v253 = vld [vmem:[#allocation7 + $0x78] sm:$0xff]
    %v254 = vld [vmem:[#allocation7 + $0x80] sm:$0xff]
    %v255 = vld [vmem:[#allocation7 + $0x88] sm:$0xff]
    %v256 = vld [vmem:[#allocation7 + $0x90] sm:$0xff]
    %v257 = vld [vmem:[#allocation7 + $0x98] sm:$0xff]
    %v258 = vld [vmem:[#allocation7 + $0xa0] sm:$0xff]
    %v259 = vld [vmem:[#allocation7 + $0xa8] sm:$0xff]
    %v260 = vld [vmem:[#allocation7 + $0xb0] sm:$0xff]
    %v261 = vld [vmem:[#allocation7 + $0xb8] sm:$0xff]
    %v262 = vld [vmem:[#allocation7 + $0xc0] sm:$0xff]
    %v263 = vld [vmem:[#allocation7 + $0xc8] sm:$0xff]
    %v264 = vld [vmem:[#allocation7 + $0xd0] sm:$0xff]
    %v265 = vld [vmem:[#allocation7 + $0xd8] sm:$0xff]
    %v266 = vld [vmem:[#allocation7 + $0xe0] sm:$0xff]
    %v267 = vld [vmem:[#allocation7 + $0xe8] sm:$0xff]
    %v268 = vld [vmem:[#allocation7 + $0xf0] sm:$0xff]
    %v269 = vld [vmem:[#allocation7 + $0xf8] sm:$0xff]
    %v270 = vld [vmem:[#allocation7 + $0x100] sm:$0xff]
    %v271 = vld [vmem:[#allocation7 + $0x108] sm:$0xff]
    %v272 = vld [vmem:[#allocation7 + $0x110] sm:$0xff]
    %v273 = vld [vmem:[#allocation7 + $0x118] sm:$0xff]
    %v274 = vld [vmem:[#allocation7 + $0x120] sm:$0xff]
    %v275 = vld [vmem:[#allocation7 + $0x128] sm:$0xff]
    %v276 = vld [vmem:[#allocation7 + $0x130] sm:$0xff]
    %v277 = vld [vmem:[#allocation7 + $0x138] sm:$0xff]
    %v278 = vld [vmem:[#allocation7 + $0x140] sm:$0xff]
    %v279 = vld [vmem:[#allocation7 + $0x148] sm:$0xff]
    %v280 = vld [vmem:[#allocation7 + $0x150] sm:$0xff]
    %v281 = vld [vmem:[#allocation7 + $0x158] sm:$0xff]
    %v282 = vld [vmem:[#allocation7 + $0x160] sm:$0xff]
    %v283 = vld [vmem:[#allocation7 + $0x168] sm:$0xff]
    %v284 = vld [vmem:[#allocation7 + $0x170] sm:$0xff]
    %v285 = vld [vmem:[#allocation7 + $0x178] sm:$0xff]
    %v286 = vld [vmem:[%s4] sm:$0x1]
    %v288 = vlaneseq
    %v289 = vshrl.u32 %v288, 7
    %v290 = vsub.s32 0, %v289
    %v291 = vrot.slane %v286, %v290
    %293 = vmatprep.subr.mxu0 0.0
    %294 = vmatpush1.msra.mxu0 %v238
    %295 = vmatprep.subr.mxu0 0.0
    %296 = vmatpush1.msra.mxu0 %v239
    %297 = vmatprep.subr.mxu0 0.0
    %298 = vmatpush1.msra.mxu0 %v240
    %299 = vmatprep.subr.mxu0 0.0
    %300 = vmatpush1.msra.mxu0 %v241
    %301 = vmatprep.subr.mxu0 0.0
    %302 = vmatpush1.msra.mxu0 %v242
    %303 = vmatprep.subr.mxu0 0.0
    %304 = vmatpush1.msra.mxu0 %v243
    %305 = vmatprep.subr.mxu0 0.0
    %306 = vmatpush1.msra.mxu0 %v244
    %307 = vmatprep.subr.mxu0 0.0
    %308 = vmatpush1.msra.mxu0 %v245
    %309 = vmatprep.subr.mxu0 0.0
    %310 = vmatpush1.msra.mxu0 %v246
    %311 = vmatprep.subr.mxu0 0.0
    %312 = vmatpush1.msra.mxu0 %v247
    %313 = vmatprep.subr.mxu0 0.0
    %314 = vmatpush1.msra.mxu0 %v248
    %315 = vmatprep.subr.mxu0 0.0
    %316 = vmatpush1.msra.mxu0 %v249
    %317 = vmatprep.subr.mxu0 0.0
    %318 = vmatpush1.msra.mxu0 %v250
    %319 = vmatprep.subr.mxu0 0.0
    %320 = vmatpush1.msra.mxu0 %v251
    %321 = vmatprep.subr.mxu0 0.0
    %322 = vmatpush1.msra.mxu0 %v252
    %323 = vmatprep.subr.mxu0 0.0
    %324 = vmatpush1.msra.mxu0 %v253
    %325 = vmatprep.subr.mxu0 0.0
    %326 = vmatpush1.msra.mxu0 %v254
    %327 = vmatprep.subr.mxu0 0.0
    %328 = vmatpush1.msra.mxu0 %v255
    %329 = vmatprep.subr.mxu0 0.0
    %330 = vmatpush1.msra.mxu0 %v256
    %331 = vmatprep.subr.mxu0 0.0
    %332 = vmatpush1.msra.mxu0 %v257
    %333 = vmatprep.subr.mxu0 0.0
    %334 = vmatpush1.msra.mxu0 %v258
    %335 = vmatprep.subr.mxu0 0.0
    %336 = vmatpush1.msra.mxu0 %v259
    %337 = vmatprep.subr.mxu0 0.0
    %338 = vmatpush1.msra.mxu0 %v260
    %339 = vmatprep.subr.mxu0 0.0
    %340 = vmatpush1.msra.mxu0 %v261
    %341 = vmatprep.subr.mxu0 0.0
    %342 = vmatpush1.msra.mxu0 %v262
    %343 = vmatprep.subr.mxu0 0.0
    %344 = vmatpush1.msra.mxu0 %v263
    %345 = vmatprep.subr.mxu0 0.0
    %346 = vmatpush1.msra.mxu0 %v264
    %347 = vmatprep.subr.mxu0 0.0
    %348 = vmatpush1.msra.mxu0 %v265
    %349 = vmatprep.subr.mxu0 0.0
    %350 = vmatpush1.msra.mxu0 %v266
    %351 = vmatprep.subr.mxu0 0.0
    %352 = vmatpush1.msra.mxu0 %v267
    %353 = vmatprep.subr.mxu0 0.0
    %354 = vmatpush1.msra.mxu0 %v268
    %355 = vmatprep.subr.mxu0 0.0
    %356 = vmatpush1.msra.mxu0 %v269
    %357 = vmatprep.mubr.f32.mxu0 %v236
    %358 = vmatmul.mubr.f32.gmra.mrb[0].mxu0 %v235
    %v359 = vpop.f32.mrb[0].mxu0
    %v360 = vadd.f32 %v291, %v359
    %v361 = vpop.f32.mrb[0].mxu0
    %362 = vdwg.mxu0
    %363 = vmatprep.subr.mxu0 0.0
    %364 = vmatpush1.msra.mxu0 %v270
    %365 = vmatprep.subr.mxu0 0.0
    %366 = vmatpush1.msra.mxu0 %v271
    %367 = vmatprep.subr.mxu0 0.0
    %368 = vmatpush1.msra.mxu0 %v272
    %369 = vmatprep.subr.mxu0 0.0
    %370 = vmatpush1.msra.mxu0 %v273
    %371 = vmatprep.subr.mxu0 0.0
    %372 = vmatpush1.msra.mxu0 %v274
    %373 = vmatprep.subr.mxu0 0.0
    %374 = vmatpush1.msra.mxu0 %v275
    %375 = vmatprep.subr.mxu0 0.0
    %376 = vmatpush1.msra.mxu0 %v276
    %377 = vmatprep.subr.mxu0 0.0
    %378 = vmatpush1.msra.mxu0 %v277
    %379 = vmatprep.subr.mxu0 0.0
    %380 = vmatpush1.msra.mxu0 %v278
    %381 = vmatprep.subr.mxu0 0.0
    %382 = vmatpush1.msra.mxu0 %v279
    %383 = vmatprep.subr.mxu0 0.0
    %384 = vmatpush1.msra.mxu0 %v280
    %385 = vmatprep.subr.mxu0 0.0
    %386 = vmatpush1.msra.mxu0 %v281
    %387 = vmatprep.subr.mxu0 0.0
    %388 = vmatpush1.msra.mxu0 %v282
    %389 = vmatprep.subr.mxu0 0.0
    %390 = vmatpush1.msra.mxu0 %v283
    %391 = vmatprep.subr.mxu0 0.0
    %392 = vmatpush1.msra.mxu0 %v284
    %393 = vmatprep.subr.mxu0 0.0
    %394 = vmatpush1.msra.mxu0 %v285
    %395 = vmatprep.subr.mxu0 0.0
    %396 = vmatpush1.msra.mxu0 0.0
    %397 = vmatprep.subr.mxu0 0.0
    %398 = vmatpush1.msra.mxu0 0.0
    %399 = vmatprep.subr.mxu0 0.0
    %400 = vmatpush1.msra.mxu0 0.0
    %401 = vmatprep.subr.mxu0 0.0
    %402 = vmatpush1.msra.mxu0 0.0
    %403 = vmatprep.subr.mxu0 0.0
    %404 = vmatpush1.msra.mxu0 0.0
    %405 = vmatprep.subr.mxu0 0.0
    %406 = vmatpush1.msra.mxu0 0.0
    %407 = vmatprep.subr.mxu0 0.0
    %408 = vmatpush1.msra.mxu0 0.0
    %409 = vmatprep.subr.mxu0 0.0
    %410 = vmatpush1.msra.mxu0 0.0
    %411 = vmatprep.subr.mxu0 0.0
    %412 = vmatpush1.msra.mxu0 0.0
    %413 = vmatprep.subr.mxu0 0.0
    %414 = vmatpush1.msra.mxu0 0.0
    %415 = vmatprep.subr.mxu0 0.0
    %416 = vmatpush1.msra.mxu0 0.0
    %417 = vmatprep.subr.mxu0 0.0
    %418 = vmatpush1.msra.mxu0 0.0
    %419 = vmatprep.subr.mxu0 0.0
    %420 = vmatpush1.msra.mxu0 0.0
    %421 = vmatprep.subr.mxu0 0.0
    %422 = vmatpush1.msra.mxu0 0.0
    %423 = vmatprep.subr.mxu0 0.0
    %424 = vmatpush1.msra.mxu0 0.0
    %425 = vmatprep.subr.mxu0 0.0
    %426 = vmatpush1.msra.mxu0 0.0
    %427 = vmatprep.mubr.f32.mxu0 0.0
    %428 = vmatmul.mubr.f32.gmra.mrb[0].mxu0 %v237
    %v429 = vpop.f32.mrb[0].mxu0
    %v430 = vadd.f32 %v360, %v429
    %v431 = vpop.f32.mrb[0].mxu0
    %432 = vdwg.mxu0
    %v433 = vtanh.pop %v430
    %v434 = vmul.f32 %v433, 1.5
    %435 = vst [vmem:[#allocation8] sm:$0xff] %v434
    // Predicated region
    $region34: #{tpu_custom_call.1} parent=1 // pred_check
      _
    $region35: #{tpu_custom_call.1} parent=1 // pred_check_branch
      %437 = sbr.rel (0) target = $region37
    $region36: #{tpu_custom_call.1} parent=1 // pred_region
      %s439 = ssub.s32 128, 128
      %440 = vsyncadd [#allocation4], %s439
      %s442 = sshll.u32 [#allocation8], 4
      %s443 = int_to_ptr.vmem [resolvable:$true] %s442
      %445 = dma.vmem_to_hbm [thread:$0]  %s443, 128, %s5, [#allocation4]
    $region37: #{tpu_custom_call.1} parent=1 // pred_fallthru
      _
    // Predicated region
    $region38: #{tpu_custom_call.1} parent=1 // pred_check
      _
    $region39: #{tpu_custom_call.1} parent=1 // pred_check_branch
      %447 = sbr.rel (0) target = $region41
    $region40: #{tpu_custom_call.1} parent=1 // pred_region
      %448 = dma.done [#allocation4], 128
    $region41: #{tpu_custom_call.1} parent=1 // pred_fallthru
      _
    %449 = vsyncpa [#allocation3], 1
    %450 = vsyncpa [#allocation6], 1
    %451 = vsyncpa [#allocation4], 1

</llo_original>
